<compile_context>
chip_gen: v7x
topology: tpu7x:2x2x1
jax: 0.10.0
libtpu: 0.0.40
codegen_flags: <defaults>
</compile_context>

<pallas_src>
import functools

import jax
import jax.numpy as jnp
from jax.experimental import pallas as pl
from jax.experimental.pallas import tpu as pltpu

HIDDEN = 64
NEG_SLOPE = 0.01   # nn.LeakyReLU() default negative_slope
LANE = 128


def _round_up(n, m):
    return ((n + m - 1) // m) * m


def _mlp_kernel(x_ref, w1_ref, b1_ref, w2_ref, b2_ref, o_ref):
    d_out = o_ref.shape[-1]
    # fc1: (tb, d_in) @ (d_in, 64) in f32 on the MXU (enormous compute slack).
    h = jnp.dot(x_ref[...], w1_ref[...], preferred_element_type=jnp.float32)
    h = h + b1_ref[...]
    h = jnp.maximum(h, NEG_SLOPE * h)            # LeakyReLU
    # fc2: (tb, 64) @ (64, d_out_padded); slice back to d_out, narrow store.
    out = jnp.dot(h, w2_ref[...], preferred_element_type=jnp.float32)
    o_ref[...] = out[:, :d_out] + b2_ref[...]


def _jnp_forward(x, w1, b1, w2, b2):
    h = x @ w1 + b1
    h = jnp.maximum(h, NEG_SLOPE * h)
    return h @ w2 + b2


def _choose_tile(batch, block_b):
    b_r = _round_up(batch, LANE)
    tb = min(_round_up(block_b, LANE), b_r)
    if b_r > LANE:
        # Cap so large batches split into >= 2 grid tiles: the "parallel"
        # batch axis then shards across both TensorCores on v7x.
        tb = min(tb, _round_up(pl.cdiv(b_r, 2), LANE))
    return max(tb, LANE)


@functools.partial(jax.jit, static_argnames=("block_b", "min_kernel_batch"))
def net_forward(x, w1, b1, w2, b2, *, block_b=4096, min_kernel_batch=256):
    """Fused forward pass of Net: fc1 -> LeakyReLU -> fc2.

    x:  (B, D_in) float32
    w1: (D_in, 64), b1: (1, 64)
    w2: (64, D_out), b2: (1, D_out)
    returns (B, D_out) float32
    """
    B, d_in = x.shape
    hidden, d_out = w2.shape

    # Tiny batches: launch/DMA overhead dwarfs the work; plain jnp is faster.
    if B < min_kernel_batch:
        return _jnp_forward(x, w1, b1, w2, b2)

    tb = _choose_tile(B, block_b)
    b_p = _round_up(B, tb)
    n_tiles = b_p // tb

    x_p = jnp.pad(x, ((0, b_p - B), (0, 0))) if b_p != B else x

    # Lane-pad w2 for the MXU; the output itself stays narrow (d_out wide).
    d_out_p = _round_up(d_out, LANE)
    w2_p = jnp.pad(w2, ((0, 0), (0, d_out_p - d_out))) if d_out_p != d_out else w2

    grid_spec = pltpu.PrefetchScalarGridSpec(
        num_scalar_prefetch=0,
        grid=(n_tiles,),
        in_specs=[
            pl.BlockSpec((tb, d_in), lambda i: (i, 0)),          # x batch tile
            pl.BlockSpec((d_in, hidden), lambda i: (0, 0)),      # w1 resident
            pl.BlockSpec((1, hidden), lambda i: (0, 0)),         # b1 resident
            pl.BlockSpec((hidden, d_out_p), lambda i: (0, 0)),   # w2 resident
            pl.BlockSpec((1, d_out), lambda i: (0, 0)),          # b2 resident
        ],
        out_specs=pl.BlockSpec((tb, d_out), lambda i: (i, 0)),   # narrow store
    )

    out_p = pl.pallas_call(
        _mlp_kernel,
        out_shape=jax.ShapeDtypeStruct((b_p, d_out), jnp.float32),
        grid_spec=grid_spec,
        compiler_params=pltpu.CompilerParams(
            dimension_semantics=("parallel",),   # batch tiles shard on v7x 2-TC
        ),
    )(x_p, w1, b1, w2_p, b2)

    return out_p[:B] if b_p != B else out_p


def init_params(key, input_size, output_size):
    """PyTorch nn.Linear default init: U[-1/sqrt(fan_in), 1/sqrt(fan_in)]."""
    k1, k2, k3, k4 = jax.random.split(key, 4)
    bound1 = 1.0 / jnp.sqrt(input_size)
    w1 = jax.random.uniform(k1, (input_size, HIDDEN), jnp.float32, -bound1, bound1)
    b1 = jax.random.uniform(k2, (1, HIDDEN), jnp.float32, -bound1, bound1)
    bound2 = 1.0 / jnp.sqrt(HIDDEN)
    w2 = jax.random.uniform(k3, (HIDDEN, output_size), jnp.float32, -bound2, bound2)
    b2 = jax.random.uniform(k4, (1, output_size), jnp.float32, -bound2, bound2)
    return w1, b1, w2, b2


# TODO(synk): fit()/predict() (BCEWithLogitsLoss + Adam training loop) are not
# part of the forward pass and are not translated.

if __name__ == "__main__":
    key = jax.random.PRNGKey(0)
    k_x, k_p, k_x2 = jax.random.split(key, 3)

    input_size = 32
    output_size = 4
    w1, b1, w2, b2 = init_params(k_p, input_size, output_size)

    # Small batch: force the kernel path (single grid tile, padded batch).
    x_small = jax.random.normal(k_x, (8, input_size), jnp.float32)
    out_small = jax.block_until_ready(
        net_forward(x_small, w1, b1, w2, b2, min_kernel_batch=0))

    # Batch above the dispatch threshold: kernel path with 2 grid tiles
    # (exercises multi-step grid, resident weights, ragged-batch padding).
    x_big = jax.random.normal(k_x2, (300, input_size), jnp.float32)
    out_big = jax.block_until_ready(net_forward(x_big, w1, b1, w2, b2))

    # Tiny batch through the jnp fast path (default threshold).
    out_tiny = jax.block_until_ready(net_forward(x_small, w1, b1, w2, b2))

    for x_in, out in ((x_small, out_small), (x_big, out_big), (x_small, out_tiny)):
        ref = _jnp_forward(x_in, w1, b1, w2, b2)
        assert out.shape == ref.shape
        # f32 matmuls everywhere -> tight parity with the f32 reference.
        assert jnp.allclose(out, ref, atol=1e-4, rtol=1e-4), \
            float(jnp.max(jnp.abs(out - ref)))

    print("KERNEL_OK")
</pallas_src>

<mosaic_0001>
module attributes {stable_mosaic.version = 11 : i64} {
  func.func @_mlp_kernel(%arg0: i32, %arg1: memref<128x32xf32, #tpu.memory_space<vmem>>, %arg2: memref<32x64xf32, #tpu.memory_space<vmem>>, %arg3: memref<1x64xf32, #tpu.memory_space<vmem>>, %arg4: memref<64x128xf32, #tpu.memory_space<vmem>>, %arg5: memref<1x4xf32, #tpu.memory_space<vmem>>, %arg6: memref<128x4xf32, #tpu.memory_space<vmem>>) attributes {dimension_semantics = [#tpu.dimension_semantics<parallel>], iteration_bounds = array<i64: 1>, scalar_prefetch = 0 : i64, scratch_operands = 0 : i64, tpu.core_type = #tpu.core_type<tc>, window_params = [{transform_indices = @transform_0, window_bounds = array<i64: 128, 32>}, {pipeline_mode = #tpu.pipeline_mode<synchronous>, transform_indices = @transform_1, window_bounds = array<i64: 32, 64>}, {pipeline_mode = #tpu.pipeline_mode<synchronous>, transform_indices = @transform_2, window_bounds = array<i64: 1, 64>}, {pipeline_mode = #tpu.pipeline_mode<synchronous>, transform_indices = @transform_3, window_bounds = array<i64: 64, 128>}, {pipeline_mode = #tpu.pipeline_mode<synchronous>, transform_indices = @transform_4, window_bounds = array<i64: 1, 4>}, {transform_indices = @transform_5, window_bounds = array<i64: 128, 4>}]} {
    %c0 = arith.constant 0 : index
    %c0_0 = arith.constant 0 : index
    %0 = vector.load %arg1[%c0, %c0_0] : memref<128x32xf32, #tpu.memory_space<vmem>>, vector<128x32xf32>
    %c0_1 = arith.constant 0 : index
    %c0_2 = arith.constant 0 : index
    %1 = vector.load %arg2[%c0_1, %c0_2] : memref<32x64xf32, #tpu.memory_space<vmem>>, vector<32x64xf32>
    %cst = arith.constant dense<0.000000e+00> : vector<128x64xf32>
    %2 = tpu.matmul %0, %1, %cst {dimension_numbers = #tpu.dot_dimension_numbers<[1], [0], [0], [1], [0, 0, 1, 1], [], []>} : vector<128x32xf32>, vector<32x64xf32>, vector<128x64xf32> -> vector<128x64xf32>
    %c0_3 = arith.constant 0 : index
    %c0_4 = arith.constant 0 : index
    %3 = vector.load %arg3[%c0_3, %c0_4] : memref<1x64xf32, #tpu.memory_space<vmem>>, vector<1x64xf32>
    %4 = vector.broadcast %3 : vector<1x64xf32> to vector<128x64xf32>
    %5 = arith.addf %2, %4 : vector<128x64xf32>
    %cst_5 = arith.constant 0.00999999977 : f32
    %6 = vector.broadcast %cst_5 : f32 to vector<128x64xf32>
    %7 = arith.mulf %6, %5 : vector<128x64xf32>
    %8 = arith.maximumf %5, %7 : vector<128x64xf32>
    %c0_6 = arith.constant 0 : index
    %c0_7 = arith.constant 0 : index
    %9 = vector.load %arg4[%c0_6, %c0_7] : memref<64x128xf32, #tpu.memory_space<vmem>>, vector<64x128xf32>
    %cst_8 = arith.constant dense<0.000000e+00> : vector<128x128xf32>
    %10 = tpu.matmul %8, %9, %cst_8 {dimension_numbers = #tpu.dot_dimension_numbers<[1], [0], [0], [1], [0, 0, 1, 1], [], []>} : vector<128x64xf32>, vector<64x128xf32>, vector<128x128xf32> -> vector<128x128xf32>
    %11 = vector.extract_strided_slice %10 {offsets = [0, 0], sizes = [128, 4], strides = [1, 1]} : vector<128x128xf32> to vector<128x4xf32>
    %c0_9 = arith.constant 0 : index
    %c0_10 = arith.constant 0 : index
    %12 = vector.load %arg5[%c0_9, %c0_10] : memref<1x4xf32, #tpu.memory_space<vmem>>, vector<1x4xf32>
    %13 = vector.broadcast %12 : vector<1x4xf32> to vector<128x4xf32>
    %14 = arith.addf %11, %13 : vector<128x4xf32>
    %c0_11 = arith.constant 0 : index
    %c0_12 = arith.constant 0 : index
    %15 = vector.load %arg6[%c0_11, %c0_12] : memref<128x4xf32, #tpu.memory_space<vmem>>, vector<128x4xf32>
    tpu.vector_store %arg6[%c0_11, %c0_12], %14 {strides = array<i32>} : memref<128x4xf32, #tpu.memory_space<vmem>>, vector<128x4xf32>,
    return
  }
  func.func @transform_0(%arg0: i32) -> (i32, i32) {
    %c0_i32 = arith.constant 0 : i32
    %c0_i32_0 = arith.constant 0 : i32
    return %arg0, %c0_i32 : i32, i32
  }
  func.func @transform_1(%arg0: i32) -> (i32, i32) {
    %c0_i32 = arith.constant 0 : i32
    %c0_i32_0 = arith.constant 0 : i32
    %c0_i32_1 = arith.constant 0 : i32
    return %c0_i32, %c0_i32_0 : i32, i32
  }
  func.func @transform_2(%arg0: i32) -> (i32, i32) {
    %c0_i32 = arith.constant 0 : i32
    %c0_i32_0 = arith.constant 0 : i32
    %c0_i32_1 = arith.constant 0 : i32
    return %c0_i32, %c0_i32_0 : i32, i32
  }
  func.func @transform_3(%arg0: i32) -> (i32, i32) {
    %c0_i32 = arith.constant 0 : i32
    %c0_i32_0 = arith.constant 0 : i32
    %c0_i32_1 = arith.constant 0 : i32
    return %c0_i32, %c0_i32_0 : i32, i32
  }
  func.func @transform_4(%arg0: i32) -> (i32, i32) {
    %c0_i32 = arith.constant 0 : i32
    %c0_i32_0 = arith.constant 0 : i32
    %c0_i32_1 = arith.constant 0 : i32
    return %c0_i32, %c0_i32_0 : i32, i32
  }
  func.func @transform_5(%arg0: i32) -> (i32, i32) {
    %c0_i32 = arith.constant 0 : i32
    %c0_i32_0 = arith.constant 0 : i32
    return %arg0, %c0_i32 : i32, i32
  }
}

</mosaic_0001>

<llo_original>
// kernel: net_forward.1
$region0: #{net_forward.1}
  #allocation0 [shape = 'u32[]', space=smem, size = 0x4, offset = 0x4, fixed_abs, tag = 'smem constant byte address 0x4 - core index']
  #allocation1 [shape = 'u32[144,128]{1,0:T(1,128)}', space=vmem, size = 0x12000, scoped, tag = 'internal scratch']
  %s0 = inlined_call_operand.vmem [shape: f32[128,32], index: 0, kind: input, shape index: {}]
  %s1 = inlined_call_operand.vmem [shape: f32[32,64], index: 1, kind: input, shape index: {}]
  %s2 = inlined_call_operand.vmem [shape: f32[1,64], index: 2, kind: input, shape index: {}]
  %s3 = inlined_call_operand.vmem [shape: f32[64,128], index: 3, kind: input, shape index: {}]
  %s4 = inlined_call_operand.vmem [shape: f32[1,4], index: 4, kind: input, shape index: {}]
  %s5 = inlined_call_operand.vmem [shape: f32[128,4], index: 5, kind: output, shape index: {}]
  %s6 = sld [smem:[#allocation0]]
  $region30: #{net_forward.1} parent=0
    _
  %s8 = ssub.s32 1, %s6
  %s9 = scalar_select 0, %s8, %s6
  // Predicated region
  $region2: #{net_forward.1} parent=0 // pred_check
    _
  $region3: #{net_forward.1} parent=0 // pred_check_branch
    %11 = sbr.rel (0) target = $region5
  $region4: #{net_forward.1} parent=0 // pred_region
    _
  $region5: #{net_forward.1} parent=0 // pred_fallthru
    _
  // Predicated region
  $region6: #{net_forward.1} parent=0 // pred_check
    _
  $region7: #{net_forward.1} parent=0 // pred_check_branch
    %13 = sbr.rel (0) target = $region9
  $region8: #{net_forward.1} parent=0 // pred_region
    _
  $region9: #{net_forward.1} parent=0 // pred_fallthru
    _
  // Predicated region
  $region10: #{net_forward.1} parent=0 // pred_check
    _
  $region11: #{net_forward.1} parent=0 // pred_check_branch
    %15 = sbr.rel (0) target = $region13
  $region12: #{net_forward.1} parent=0 // pred_region
    _
  $region13: #{net_forward.1} parent=0 // pred_fallthru
    _
  // Predicated region
  $region14: #{net_forward.1} parent=0 // pred_check
    _
  $region15: #{net_forward.1} parent=0 // pred_check_branch
    %17 = sbr.rel (0) target = $region17
  $region16: #{net_forward.1} parent=0 // pred_region
    _
  $region17: #{net_forward.1} parent=0 // pred_fallthru
    _
  // Predicated region
  $region18: #{net_forward.1} parent=0 // pred_check
    _
  $region19: #{net_forward.1} parent=0 // pred_check_branch
    %19 = sbr.rel (0) target = $region21
  $region20: #{net_forward.1} parent=0 // pred_region
    _
  $region21: #{net_forward.1} parent=0 // pred_fallthru
    _
  %v20 = vld [vmem:[%s0] sm:$0xff]
  %v21 = vld [vmem:[%s0 + $0x8] sm:$0xff]
  %v22 = vld [vmem:[%s0 + $0x10] sm:$0xff]
  %v23 = vld [vmem:[%s0 + $0x18] sm:$0xff]
  %v24 = vld [vmem:[%s0 + $0x20] sm:$0xff]
  %v25 = vld [vmem:[%s0 + $0x28] sm:$0xff]
  %v26 = vld [vmem:[%s0 + $0x30] sm:$0xff]
  %v27 = vld [vmem:[%s0 + $0x38] sm:$0xff]
  %v28 = vld [vmem:[%s0 + $0x40] sm:$0xff]
  %v29 = vld [vmem:[%s0 + $0x48] sm:$0xff]
  %v30 = vld [vmem:[%s0 + $0x50] sm:$0xff]
  %v31 = vld [vmem:[%s0 + $0x58] sm:$0xff]
  %v32 = vld [vmem:[%s0 + $0x60] sm:$0xff]
  %v33 = vld [vmem:[%s0 + $0x68] sm:$0xff]
  %v34 = vld [vmem:[%s0 + $0x70] sm:$0xff]
  %v35 = vld [vmem:[%s0 + $0x78] sm:$0xff]
  %v36 = vld [vmem:[%s1] sm:$0xff]
  %v37 = vld [vmem:[%s1 + $0x8] sm:$0xff]
  %v38 = vld [vmem:[%s1 + $0x10] sm:$0xff]
  %v39 = vld [vmem:[%s1 + $0x18] sm:$0xff]
  %v40 = vld [vmem:[%s2] sm:$0x1]
  %v42 = vlaneseq
  %v43 = vshrl.u32 %v42, 7
  %v44 = vsub.s32 0, %v43
  %v45 = vrot.slane %v40, %v44
  %vm47 = vcmask 261120
  %v49 = vsel %vm47, %v20, 0
  %v52 = vsel %vm47, %v21, 0
  %v55 = vsel %vm47, %v22, 0
  %v58 = vsel %vm47, %v23, 0
  %v61 = vsel %vm47, %v24, 0
  %v64 = vsel %vm47, %v25, 0
  %v67 = vsel %vm47, %v26, 0
  %v70 = vsel %vm47, %v27, 0
  %v73 = vsel %vm47, %v28, 0
  %v76 = vsel %vm47, %v29, 0
  %v79 = vsel %vm47, %v30, 0
  %v82 = vsel %vm47, %v31, 0
  %v85 = vsel %vm47, %v32, 0
  %v88 = vsel %vm47, %v33, 0
  %v91 = vsel %vm47, %v34, 0
  %v94 = vsel %vm47, %v35, 0
  %96 = vmatprep.subr.mxu0 0.0
  %97 = vmatpush1.msra.mxu0 %v36
  %98 = vmatprep.subr.mxu0 0.0
  %99 = vmatpush1.msra.mxu0 %v37
  %100 = vmatprep.subr.mxu0 0.0
  %101 = vmatpush1.msra.mxu0 %v38
  %102 = vmatprep.subr.mxu0 0.0
  %103 = vmatpush1.msra.mxu0 %v39
  %104 = vmatprep.subr.mxu0 0.0
  %105 = vmatpush1.msra.mxu0 0.0
  %106 = vmatprep.subr.mxu0 0.0
  %107 = vmatpush1.msra.mxu0 0.0
  %108 = vmatprep.subr.mxu0 0.0
  %109 = vmatpush1.msra.mxu0 0.0
  %110 = vmatprep.subr.mxu0 0.0
  %111 = vmatpush1.msra.mxu0 0.0
  %112 = vmatprep.subr.mxu0 0.0
  %113 = vmatpush1.msra.mxu0 0.0
  %114 = vmatprep.subr.mxu0 0.0
  %115 = vmatpush1.msra.mxu0 0.0
  %116 = vmatprep.subr.mxu0 0.0
  %117 = vmatpush1.msra.mxu0 0.0
  %118 = vmatprep.subr.mxu0 0.0
  %119 = vmatpush1.msra.mxu0 0.0
  %120 = vmatprep.subr.mxu0 0.0
  %121 = vmatpush1.msra.mxu0 0.0
  %122 = vmatprep.subr.mxu0 0.0
  %123 = vmatpush1.msra.mxu0 0.0
  %124 = vmatprep.subr.mxu0 0.0
  %125 = vmatpush1.msra.mxu0 0.0
  %126 = vmatprep.subr.mxu0 0.0
  %127 = vmatpush1.msra.mxu0 0.0
  %128 = vmatprep.subr.mxu0 0.0
  %129 = vmatpush1.msra.mxu0 0.0
  %130 = vmatprep.subr.mxu0 0.0
  %131 = vmatpush1.msra.mxu0 0.0
  %132 = vmatprep.subr.mxu0 0.0
  %133 = vmatpush1.msra.mxu0 0.0
  %134 = vmatprep.subr.mxu0 0.0
  %135 = vmatpush1.msra.mxu0 0.0
  %136 = vmatprep.subr.mxu0 0.0
  %137 = vmatpush1.msra.mxu0 0.0
  %138 = vmatprep.subr.mxu0 0.0
  %139 = vmatpush1.msra.mxu0 0.0
  %140 = vmatprep.subr.mxu0 0.0
  %141 = vmatpush1.msra.mxu0 0.0
  %142 = vmatprep.subr.mxu0 0.0
  %143 = vmatpush1.msra.mxu0 0.0
  %144 = vmatprep.subr.mxu0 0.0
  %145 = vmatpush1.msra.mxu0 0.0
  %146 = vmatprep.subr.mxu0 0.0
  %147 = vmatpush1.msra.mxu0 0.0
  %148 = vmatprep.subr.mxu0 0.0
  %149 = vmatpush1.msra.mxu0 0.0
  %150 = vmatprep.subr.mxu0 0.0
  %151 = vmatpush1.msra.mxu0 0.0
  %152 = vmatprep.subr.mxu0 0.0
  %153 = vmatpush1.msra.mxu0 0.0
  %154 = vmatprep.subr.mxu0 0.0
  %155 = vmatpush1.msra.mxu0 0.0
  %156 = vmatprep.subr.mxu0 0.0
  %157 = vmatpush1.msra.mxu0 0.0
  %158 = vmatprep.subr.mxu0 0.0
  %159 = vmatpush1.msra.mxu0 0.0
  %160 = vmatprep.mubr.f32.mxu0 0.0
  %161 = vmatmul.mubr.f32.gmra.mrb[0].mxu0 %v49
  %v162 = vpop.f32.mrb[0].mxu0
  %v163 = vadd.f32 %v45, %v162
  %v164 = vpop.f32.mrb[0].mxu0
  %165 = vmatprep.mubr.f32.mxu0 0.0
  %166 = vmatmul.mubr.f32.gmra.mrb[0].mxu0 %v52
  %v167 = vpop.f32.mrb[0].mxu0
  %v168 = vadd.f32 %v45, %v167
  %v169 = vpop.f32.mrb[0].mxu0
  %170 = vmatprep.mubr.f32.mxu0 0.0
  %171 = vmatmul.mubr.f32.gmra.mrb[0].mxu0 %v55
  %v172 = vpop.f32.mrb[0].mxu0
  %v173 = vadd.f32 %v45, %v172
  %v174 = vpop.f32.mrb[0].mxu0
  %175 = vmatprep.mubr.f32.mxu0 0.0
  %176 = vmatmul.mubr.f32.gmra.mrb[0].mxu0 %v58
  %v177 = vpop.f32.mrb[0].mxu0
  %v178 = vadd.f32 %v45, %v177
  %v179 = vpop.f32.mrb[0].mxu0
  %180 = vmatprep.mubr.f32.mxu0 0.0
  %181 = vmatmul.mubr.f32.gmra.mrb[0].mxu0 %v61
  %v182 = vpop.f32.mrb[0].mxu0
  %v183 = vadd.f32 %v45, %v182
  %v184 = vpop.f32.mrb[0].mxu0
  %185 = vmatprep.mubr.f32.mxu0 0.0
  %186 = vmatmul.mubr.f32.gmra.mrb[0].mxu0 %v64
  %v187 = vpop.f32.mrb[0].mxu0
  %v188 = vadd.f32 %v45, %v187
  %v189 = vpop.f32.mrb[0].mxu0
  %190 = vmatprep.mubr.f32.mxu0 0.0
  %191 = vmatmul.mubr.f32.gmra.mrb[0].mxu0 %v67
  %v192 = vpop.f32.mrb[0].mxu0
  %v193 = vadd.f32 %v45, %v192
  %v194 = vpop.f32.mrb[0].mxu0
  %195 = vmatprep.mubr.f32.mxu0 0.0
  %196 = vmatmul.mubr.f32.gmra.mrb[0].mxu0 %v70
  %v197 = vpop.f32.mrb[0].mxu0
  %v198 = vadd.f32 %v45, %v197
  %v199 = vpop.f32.mrb[0].mxu0
  %200 = vmatprep.mubr.f32.mxu0 0.0
  %201 = vmatmul.mubr.f32.gmra.mrb[0].mxu0 %v73
  %v202 = vpop.f32.mrb[0].mxu0
  %v203 = vadd.f32 %v45, %v202
  %v204 = vpop.f32.mrb[0].mxu0
  %205 = vmatprep.mubr.f32.mxu0 0.0
  %206 = vmatmul.mubr.f32.gmra.mrb[0].mxu0 %v76
  %v207 = vpop.f32.mrb[0].mxu0
  %v208 = vadd.f32 %v45, %v207
  %v209 = vpop.f32.mrb[0].mxu0
  %210 = vmatprep.mubr.f32.mxu0 0.0
  %211 = vmatmul.mubr.f32.gmra.mrb[0].mxu0 %v79
  %v212 = vpop.f32.mrb[0].mxu0
  %v213 = vadd.f32 %v45, %v212
  %v214 = vpop.f32.mrb[0].mxu0
  %215 = vmatprep.mubr.f32.mxu0 0.0
  %216 = vmatmul.mubr.f32.gmra.mrb[0].mxu0 %v82
  %v217 = vpop.f32.mrb[0].mxu0
  %v218 = vadd.f32 %v45, %v217
  %v219 = vpop.f32.mrb[0].mxu0
  %220 = vmatprep.mubr.f32.mxu0 0.0
  %221 = vmatmul.mubr.f32.gmra.mrb[0].mxu0 %v85
  %v222 = vpop.f32.mrb[0].mxu0
  %v223 = vadd.f32 %v45, %v222
  %v224 = vpop.f32.mrb[0].mxu0
  %225 = vmatprep.mubr.f32.mxu0 0.0
  %226 = vmatmul.mubr.f32.gmra.mrb[0].mxu0 %v88
  %v227 = vpop.f32.mrb[0].mxu0
  %v228 = vadd.f32 %v45, %v227
  %v229 = vpop.f32.mrb[0].mxu0
  %230 = vmatprep.mubr.f32.mxu0 0.0
  %231 = vmatmul.mubr.f32.gmra.mrb[0].mxu0 %v91
  %v232 = vpop.f32.mrb[0].mxu0
  %v233 = vadd.f32 %v45, %v232
  %v234 = vpop.f32.mrb[0].mxu0
  %235 = vmatprep.mubr.f32.mxu0 0.0
  %236 = vmatmul.mubr.f32.gmra.mrb[0].mxu0 %v94
  %v237 = vpop.f32.mrb[0].mxu0
  %v238 = vadd.f32 %v45, %v237
  %v239 = vpop.f32.mrb[0].mxu0
  %240 = vdwg.mxu0
  %v241 = vmul.f32 %v163, 0.01
  %v242 = vmul.f32 %v168, 0.01
  %v243 = vmul.f32 %v173, 0.01
  %v244 = vmul.f32 %v178, 0.01
  %v245 = vmul.f32 %v183, 0.01
  %v246 = vmul.f32 %v188, 0.01
  %v247 = vmul.f32 %v193, 0.01
  %v248 = vmul.f32 %v198, 0.01
  %v249 = vmul.f32 %v203, 0.01
  %v250 = vmul.f32 %v208, 0.01
  %v251 = vmul.f32 %v213, 0.01
  %v252 = vmul.f32 %v218, 0.01
  %v253 = vmul.f32 %v223, 0.01
  %v254 = vmul.f32 %v228, 0.01
  %v255 = vmul.f32 %v233, 0.01
  %v256 = vmul.f32 %v238, 0.01
  %v257 = vmax.f32 %v163, %v241
  %v258 = vmax.f32 %v168, %v242
  %v259 = vmax.f32 %v173, %v243
  %v260 = vmax.f32 %v178, %v244
  %v261 = vmax.f32 %v183, %v245
  %v262 = vmax.f32 %v188, %v246
  %v263 = vmax.f32 %v193, %v247
  %v264 = vmax.f32 %v198, %v248
  %v265 = vmax.f32 %v203, %v249
  %v266 = vmax.f32 %v208, %v250
  %v267 = vmax.f32 %v213, %v251
  %v268 = vmax.f32 %v218, %v252
  %v269 = vmax.f32 %v223, %v253
  %v270 = vmax.f32 %v228, %v254
  %v271 = vmax.f32 %v233, %v255
  %v272 = vmax.f32 %v238, %v256
  %v273 = vld [vmem:[%s3] sm:$0xff]
  %v274 = vld [vmem:[%s3 + $0x8] sm:$0xff]
  %v275 = vld [vmem:[%s3 + $0x10] sm:$0xff]
  %v276 = vld [vmem:[%s3 + $0x18] sm:$0xff]
  %v277 = vld [vmem:[%s3 + $0x20] sm:$0xff]
  %v278 = vld [vmem:[%s3 + $0x28] sm:$0xff]
  %v279 = vld [vmem:[%s3 + $0x30] sm:$0xff]
  %v280 = vld [vmem:[%s3 + $0x38] sm:$0xff]
  %vm281 = vcmask 523264
  %v283 = vsel %vm281, %v257, 0
  %v286 = vsel %vm281, %v258, 0
  %v289 = vsel %vm281, %v259, 0
  %v292 = vsel %vm281, %v260, 0
  %v295 = vsel %vm281, %v261, 0
  %v298 = vsel %vm281, %v262, 0
  %v301 = vsel %vm281, %v263, 0
  %v304 = vsel %vm281, %v264, 0
  %v307 = vsel %vm281, %v265, 0
  %v310 = vsel %vm281, %v266, 0
  %v313 = vsel %vm281, %v267, 0
  %v316 = vsel %vm281, %v268, 0
  %v319 = vsel %vm281, %v269, 0
  %v322 = vsel %vm281, %v270, 0
  %v325 = vsel %vm281, %v271, 0
  %v328 = vsel %vm281, %v272, 0
  %330 = vmatprep.subr.mxu0 0.0
  %331 = vmatpush1.msra.mxu0 %v273
  %332 = vmatprep.subr.mxu0 0.0
  %333 = vmatpush1.msra.mxu0 %v274
  %334 = vmatprep.subr.mxu0 0.0
  %335 = vmatpush1.msra.mxu0 %v275
  %336 = vmatprep.subr.mxu0 0.0
  %337 = vmatpush1.msra.mxu0 %v276
  %338 = vmatprep.subr.mxu0 0.0
  %339 = vmatpush1.msra.mxu0 %v277
  %340 = vmatprep.subr.mxu0 0.0
  %341 = vmatpush1.msra.mxu0 %v278
  %342 = vmatprep.subr.mxu0 0.0
  %343 = vmatpush1.msra.mxu0 %v279
  %344 = vmatprep.subr.mxu0 0.0
  %345 = vmatpush1.msra.mxu0 %v280
  %346 = vmatprep.subr.mxu0 0.0
  %347 = vmatpush1.msra.mxu0 0.0
  %348 = vmatprep.subr.mxu0 0.0
  %349 = vmatpush1.msra.mxu0 0.0
  %350 = vmatprep.subr.mxu0 0.0
  %351 = vmatpush1.msra.mxu0 0.0
  %352 = vmatprep.subr.mxu0 0.0
  %353 = vmatpush1.msra.mxu0 0.0
  %354 = vmatprep.subr.mxu0 0.0
  %355 = vmatpush1.msra.mxu0 0.0
  %356 = vmatprep.subr.mxu0 0.0
  %357 = vmatpush1.msra.mxu0 0.0
  %358 = vmatprep.subr.mxu0 0.0
  %359 = vmatpush1.msra.mxu0 0.0
  %360 = vmatprep.subr.mxu0 0.0
  %361 = vmatpush1.msra.mxu0 0.0
  %362 = vmatprep.subr.mxu0 0.0
  %363 = vmatpush1.msra.mxu0 0.0
  %364 = vmatprep.subr.mxu0 0.0
  %365 = vmatpush1.msra.mxu0 0.0
  %366 = vmatprep.subr.mxu0 0.0
  %367 = vmatpush1.msra.mxu0 0.0
  %368 = vmatprep.subr.mxu0 0.0
  %369 = vmatpush1.msra.mxu0 0.0
  %370 = vmatprep.subr.mxu0 0.0
  %371 = vmatpush1.msra.mxu0 0.0
  %372 = vmatprep.subr.mxu0 0.0
  %373 = vmatpush1.msra.mxu0 0.0
  %374 = vmatprep.subr.mxu0 0.0
  %375 = vmatpush1.msra.mxu0 0.0
  %376 = vmatprep.subr.mxu0 0.0
  %377 = vmatpush1.msra.mxu0 0.0
  %378 = vmatprep.subr.mxu0 0.0
  %379 = vmatpush1.msra.mxu0 0.0
  %380 = vmatprep.subr.mxu0 0.0
  %381 = vmatpush1.msra.mxu0 0.0
  %382 = vmatprep.subr.mxu0 0.0
  %383 = vmatpush1.msra.mxu0 0.0
  %384 = vmatprep.subr.mxu0 0.0
  %385 = vmatpush1.msra.mxu0 0.0
  %386 = vmatprep.subr.mxu0 0.0
  %387 = vmatpush1.msra.mxu0 0.0
  %388 = vmatprep.subr.mxu0 0.0
  %389 = vmatpush1.msra.mxu0 0.0
  %390 = vmatprep.subr.mxu0 0.0
  %391 = vmatpush1.msra.mxu0 0.0
  %392 = vmatprep.subr.mxu0 0.0
  %393 = vmatpush1.msra.mxu0 0.0
  %394 = vmatprep.mubr.f32.mxu0 0.0
  %395 = vmatmul.mubr.f32.gmra.mrb[0].mxu0 %v283
  %v396 = vpop.f32.mrb[0].mxu0
  %v397 = vadd.f32 0.0, %v396
  %v398 = vpop.f32.mrb[0].mxu0
  %399 = vmatprep.mubr.f32.mxu0 0.0
  %400 = vmatmul.mubr.f32.gmra.mrb[0].mxu0 %v286
  %v401 = vpop.f32.mrb[0].mxu0
  %v402 = vadd.f32 0.0, %v401
  %v403 = vpop.f32.mrb[0].mxu0
  %404 = vmatprep.mubr.f32.mxu0 0.0
  %405 = vmatmul.mubr.f32.gmra.mrb[0].mxu0 %v289
  %v406 = vpop.f32.mrb[0].mxu0
  %v407 = vadd.f32 0.0, %v406
  %v408 = vpop.f32.mrb[0].mxu0
  %409 = vmatprep.mubr.f32.mxu0 0.0
  %410 = vmatmul.mubr.f32.gmra.mrb[0].mxu0 %v292
  %v411 = vpop.f32.mrb[0].mxu0
  %v412 = vadd.f32 0.0, %v411
  %v413 = vpop.f32.mrb[0].mxu0
  %414 = vmatprep.mubr.f32.mxu0 0.0
  %415 = vmatmul.mubr.f32.gmra.mrb[0].mxu0 %v295
  %v416 = vpop.f32.mrb[0].mxu0
  %v417 = vadd.f32 0.0, %v416
  %v418 = vpop.f32.mrb[0].mxu0
  %419 = vmatprep.mubr.f32.mxu0 0.0
  %420 = vmatmul.mubr.f32.gmra.mrb[0].mxu0 %v298
  %v421 = vpop.f32.mrb[0].mxu0
  %v422 = vadd.f32 0.0, %v421
  %v423 = vpop.f32.mrb[0].mxu0
  %424 = vmatprep.mubr.f32.mxu0 0.0
  %425 = vmatmul.mubr.f32.gmra.mrb[0].mxu0 %v301
  %v426 = vpop.f32.mrb[0].mxu0
  %v427 = vadd.f32 0.0, %v426
  %v428 = vpop.f32.mrb[0].mxu0
  %429 = vmatprep.mubr.f32.mxu0 0.0
  %430 = vmatmul.mubr.f32.gmra.mrb[0].mxu0 %v304
  %v431 = vpop.f32.mrb[0].mxu0
  %v432 = vadd.f32 0.0, %v431
  %v433 = vpop.f32.mrb[0].mxu0
  %434 = vmatprep.mubr.f32.mxu0 0.0
  %435 = vmatmul.mubr.f32.gmra.mrb[0].mxu0 %v307
  %v436 = vpop.f32.mrb[0].mxu0
  %v437 = vadd.f32 0.0, %v436
  %v438 = vpop.f32.mrb[0].mxu0
  %439 = vmatprep.mubr.f32.mxu0 0.0
  %440 = vmatmul.mubr.f32.gmra.mrb[0].mxu0 %v310
  %v441 = vpop.f32.mrb[0].mxu0
  %v442 = vadd.f32 0.0, %v441
  %v443 = vpop.f32.mrb[0].mxu0
  %444 = vmatprep.mubr.f32.mxu0 0.0
  %445 = vmatmul.mubr.f32.gmra.mrb[0].mxu0 %v313
  %v446 = vpop.f32.mrb[0].mxu0
  %v447 = vadd.f32 0.0, %v446
  %v448 = vpop.f32.mrb[0].mxu0
  %449 = vmatprep.mubr.f32.mxu0 0.0
  %450 = vmatmul.mubr.f32.gmra.mrb[0].mxu0 %v316
  %v451 = vpop.f32.mrb[0].mxu0
  %v452 = vadd.f32 0.0, %v451
  %v453 = vpop.f32.mrb[0].mxu0
  %454 = vmatprep.mubr.f32.mxu0 0.0
  %455 = vmatmul.mubr.f32.gmra.mrb[0].mxu0 %v319
  %v456 = vpop.f32.mrb[0].mxu0
  %v457 = vadd.f32 0.0, %v456
  %v458 = vpop.f32.mrb[0].mxu0
  %459 = vmatprep.mubr.f32.mxu0 0.0
  %460 = vmatmul.mubr.f32.gmra.mrb[0].mxu0 %v322
  %v461 = vpop.f32.mrb[0].mxu0
  %v462 = vadd.f32 0.0, %v461
  %v463 = vpop.f32.mrb[0].mxu0
  %464 = vmatprep.mubr.f32.mxu0 0.0
  %465 = vmatmul.mubr.f32.gmra.mrb[0].mxu0 %v325
  %v466 = vpop.f32.mrb[0].mxu0
  %v467 = vadd.f32 0.0, %v466
  %v468 = vpop.f32.mrb[0].mxu0
  %469 = vmatprep.mubr.f32.mxu0 0.0
  %470 = vmatmul.mubr.f32.gmra.mrb[0].mxu0 %v328
  %v471 = vpop.f32.mrb[0].mxu0
  %v472 = vadd.f32 0.0, %v471
  %v473 = vpop.f32.mrb[0].mxu0
  %474 = vdwg.mxu0
  %v475 = vld [vmem:[%s4] sm:$0x1]
  %v477 = vlaneseq
  %v478 = vshrl.u32 %v477, 7
  %v479 = vsub.s32 0, %v478
  %v480 = vrot.slane %v475, %v479
  %v482 = vadd.f32 %v397, %v480
  %v483 = vadd.f32 %v402, %v480
  %v484 = vadd.f32 %v407, %v480
  %v485 = vadd.f32 %v412, %v480
  %v486 = vadd.f32 %v417, %v480
  %v487 = vadd.f32 %v422, %v480
  %v488 = vadd.f32 %v427, %v480
  %v489 = vadd.f32 %v432, %v480
  %v490 = vadd.f32 %v437, %v480
  %v491 = vadd.f32 %v442, %v480
  %v492 = vadd.f32 %v447, %v480
  %v493 = vadd.f32 %v452, %v480
  %v494 = vadd.f32 %v457, %v480
  %v495 = vadd.f32 %v462, %v480
  %v496 = vadd.f32 %v467, %v480
  %v497 = vadd.f32 %v472, %v480
  %vm498 = vcmask 31744
  %499 = vst.msk [vmem:[%s5] sm:$0xff] %vm498, %v482
  %500 = vst.msk [vmem:[%s5 + $0x8] sm:$0xff] %vm498, %v483
  %501 = vst.msk [vmem:[%s5 + $0x10] sm:$0xff] %vm498, %v484
  %502 = vst.msk [vmem:[%s5 + $0x18] sm:$0xff] %vm498, %v485
  %503 = vst.msk [vmem:[%s5 + $0x20] sm:$0xff] %vm498, %v486
  %504 = vst.msk [vmem:[%s5 + $0x28] sm:$0xff] %vm498, %v487
  %505 = vst.msk [vmem:[%s5 + $0x30] sm:$0xff] %vm498, %v488
  %506 = vst.msk [vmem:[%s5 + $0x38] sm:$0xff] %vm498, %v489
  %507 = vst.msk [vmem:[%s5 + $0x40] sm:$0xff] %vm498, %v490
  %508 = vst.msk [vmem:[%s5 + $0x48] sm:$0xff] %vm498, %v491
  %509 = vst.msk [vmem:[%s5 + $0x50] sm:$0xff] %vm498, %v492
  %510 = vst.msk [vmem:[%s5 + $0x58] sm:$0xff] %vm498, %v493
  %511 = vst.msk [vmem:[%s5 + $0x60] sm:$0xff] %vm498, %v494
  %512 = vst.msk [vmem:[%s5 + $0x68] sm:$0xff] %vm498, %v495
  %513 = vst.msk [vmem:[%s5 + $0x70] sm:$0xff] %vm498, %v496
  %514 = vst.msk [vmem:[%s5 + $0x78] sm:$0xff] %vm498, %v497
  // Predicated region
  $region22: #{net_forward.1} parent=0 // pred_check
    _
  $region23: #{net_forward.1} parent=0 // pred_check_branch
    %516 = sbr.rel (0) target = $region25
  $region24: #{net_forward.1} parent=0 // pred_region
    _
  $region25: #{net_forward.1} parent=0 // pred_fallthru
    _
  // Predicated region
  $region26: #{net_forward.1} parent=0 // pred_check
    _
  $region27: #{net_forward.1} parent=0 // pred_check_branch
    %518 = sbr.rel (0) target = $region29
  $region28: #{net_forward.1} parent=0 // pred_region
    _
  $region29: #{net_forward.1} parent=0 // pred_fallthru
    _

</llo_original>
